<compile_context>
chip_gen: v6e
topology: v6e:2x2x1
jax: 0.10.0
libtpu: 0.0.40
codegen_flags: <defaults>
</compile_context>

<pallas_src>
import jax
import jax.numpy as jnp
from jax.experimental import pallas as pl
from jax.experimental.pallas import tpu as pltpu


def _int_passthrough_kernel(x_ref, o_ref):
    # x_ref / o_ref: (1,) int32 refs in SMEM. Pure scalar-unit move;
    # never touches VMEM, vregs, VPU, or the MXU.
    o_ref[0] = x_ref[0]


# Built once at module scope; no grid (nothing to pipeline for one scalar).
_int_scalar_call = pl.pallas_call(
    _int_passthrough_kernel,
    out_shape=jax.ShapeDtypeStruct((1,), jnp.int32),
    in_specs=[pl.BlockSpec(memory_space=pltpu.MemorySpace.SMEM)],
    out_specs=pl.BlockSpec(memory_space=pltpu.MemorySpace.SMEM),
    input_output_aliases={0: 0},  # output reuses the (1,) i32 input buffer
    cost_estimate=pl.CostEstimate(flops=0, transcendentals=0, bytes_accessed=8),
)


@jax.jit
def _forward(val):
    # val: 0-d int8. Widen to i32 (SMEM scalar path is 32-bit) inside the same
    # jitted program as the pallas_call -> a single executable dispatch.
    x = val.astype(jnp.int32).reshape(1)
    return _int_scalar_call(x)


def aten_int_tensor_char_dtype_device(val):
    """Device-resident variant: returns a (1,) int32 jax.Array (no D2H sync)."""
    if not (isinstance(val, jax.Array) and val.dtype == jnp.int8):
        val = jnp.asarray(val, dtype=jnp.int8)
    return _forward(val)


def aten_int_tensor_char_dtype(val):
    """val: 0-d int8 array -> Python int, matching torch's int(val)."""
    out = aten_int_tensor_char_dtype_device(val)
    # TODO(synk): the i64 widening of aten.Int.Tensor happens host-side here
    # (Python ints are arbitrary precision), since the on-device scalar path is
    # 32-bit. device_get blocks and does exactly one device->host transfer.
    return int(jax.device_get(out)[0])


if __name__ == "__main__":
    key = jax.random.PRNGKey(0)
    # Deterministic 0-d int8 input (annotate_args: [], torch.int8).
    # maxval=128 (exclusive) so the full int8 range [-128, 127] is reachable.
    val = jax.random.randint(
        key, shape=(), minval=-128, maxval=128, dtype=jnp.int32
    ).astype(jnp.int8)

    # Run the kernel once and block on the device result.
    out_dev = aten_int_tensor_char_dtype_device(val)
    jax.block_until_ready(out_dev)

    result = aten_int_tensor_char_dtype(val)
    expected = int(jax.device_get(val.astype(jnp.int32)))
    assert isinstance(result, int)
    assert result == expected, (result, expected)
    print("KERNEL_OK")
</pallas_src>

<mosaic_0001>
module attributes {stable_mosaic.version = 11 : i64} {
  func.func @_int_passthrough_kernel(%arg0: memref<1xi32, #tpu.memory_space<smem>>, %arg1: memref<1xi32, #tpu.memory_space<smem>>) attributes {dimension_semantics = [], scalar_prefetch = 0 : i64, scratch_operands = 0 : i64, tpu.core_type = #tpu.core_type<tc>} {
    %c0 = arith.constant 0 : index
    %0 = memref.load %arg0[%c0] : memref<1xi32, #tpu.memory_space<smem>>
    %c0_0 = arith.constant 0 : index
    %1 = memref.load %arg1[%c0_0] : memref<1xi32, #tpu.memory_space<smem>>
    memref.store %0, %arg1[%c0_0] : memref<1xi32, #tpu.memory_space<smem>>
    return
  }
}

</mosaic_0001>

<llo_original>
// kernel: _forward.1
$region0: #{_forward.1}
  #allocation0 [shape = 'u32[]', space=smem, size = 0x4, offset = 0x4, fixed_abs, tag = 'smem constant byte address 0x4 - core index']
  #allocation1 [shape = 'u32[144,128]{1,0:T(1,128)}', space=vmem, size = 0x12000, scoped, tag = 'internal scratch']
  #allocation2 [shape = 's32[1]{0:T(128)S(6)}', space=smem, size = 0x200, scoped, tag = 'scoped memory for _forward.1']
  %s0 = inlined_call_operand.<no memory space> [shape: s32[1], index: 0, kind: input, shape index: {}, may-alias: {0,1}]
  %s1 = inlined_call_operand.hbm [shape: s32[1], index: 1, kind: output, shape index: {}, may-alias: {0,1}]
  %s2 = sld [smem:[#allocation0]]
  $region14: #{_forward.1} parent=0
    _
  %s4 = ssub.s32 1, %s2
  %s5 = scalar_select 0, %s4, %s2
  %6 = sst [smem:[#allocation2]] %s0
  $region1: #{_forward.1} parent=0
    #allocation3 [shape = 'u8[512]{0}', space=smem, size = 0x200, scoped, tag = 'output window, operand 0, single buffered']
    #allocation4 [shape = 's32[1]{0}', space=sflag, size = 0x4, scoped, tag = 'scoped memory for _forward.1']
    %7 = vsyncpa [#allocation4], 0
    // Predicated region
    $region2: #{_forward.1} parent=1 // pred_check
      _
    $region3: #{_forward.1} parent=1 // pred_check_branch
      %9 = sbr.rel (0) target = $region5
    $region4: #{_forward.1} parent=1 // pred_region
      _
    $region5: #{_forward.1} parent=1 // pred_fallthru
      _
    %s10 = sld [smem:[#allocation2]]
    %s11 = scalar_lea.smem [#allocation3], 0
    %12 = sst [smem:[%s11]] %s10
    // Predicated region
    $region6: #{_forward.1} parent=1 // pred_check
      _
    $region7: #{_forward.1} parent=1 // pred_check_branch
      %14 = sbr.rel (0) target = $region9
    $region8: #{_forward.1} parent=1 // pred_region
      %s16 = ssub.s32 16, 16
      %17 = vsyncadd [#allocation4], %s16
      %20 = dma.smem_to_hbm [#allocation3], 16, %s1, [#allocation4]
    $region9: #{_forward.1} parent=1 // pred_fallthru
      _
    // Predicated region
    $region10: #{_forward.1} parent=1 // pred_check
      _
    $region11: #{_forward.1} parent=1 // pred_check_branch
      %22 = sbr.rel (0) target = $region13
    $region12: #{_forward.1} parent=1 // pred_region
      %23 = dma.done [#allocation4], 16
    $region13: #{_forward.1} parent=1 // pred_fallthru
      _
    %24 = sfence
    %25 = vsyncpa [#allocation4], 1

</llo_original>
